<compile_context>
chip_gen: v6e
topology: v6e:2x2x1
jax: 0.10.0
libtpu: 0.0.40
codegen_flags: <defaults>
</compile_context>

<pallas_src>
import functools
import math

import numpy as np
import jax
import jax.numpy as jnp
from jax import lax
from jax.experimental import pallas as pl
from jax.experimental.pallas import tpu as pltpu


def _sincos_kernel(tile_r, k, offset_ref, inv_div_ref, bias_ref, out_ref):
    """Writes one (tile_r, lane_w) lane-dense slab of the flattened table.

    Each flat row covers k = lane_w // dembed consecutive positions, so for
    column j:  channel  = j %  dembed          (pure column function)
               col_pos  = j // dembed          (pure column function)
    and      angle = (offset + global_row*k) * inv_div[j] + bias[j]
    with     bias[j] = col_pos[j]*inv_div[j] + (channel[j] & 1) * pi/2,
    i.e. sin channels get sin(angle), cos channels get sin(angle + pi/2).
    Only 1 EUP op (sin) and ~3 VPU ops per element; no HBM reads besides the
    two resident (1, lane_w) column vectors.
    """
    i = pl.program_id(0)
    base = offset_ref[0] + i * (tile_r * k)                  # first position of tile
    row = lax.broadcasted_iota(jnp.int32, out_ref.shape, 0)  # row within tile
    pos = (base + row * k).astype(jnp.float32)               # per-row position
    angle = pos * inv_div_ref[...] + bias_ref[...]           # (1,lane_w) broadcasts
    out_ref[...] = jnp.sin(angle).astype(out_ref.dtype)


def _pick_lane_width(seq, dembed, cap=2048):
    """lane_w = k*dembed with k | seq; prefer k*dembed % 128 == 0 (lane-dense)."""
    g = math.gcd(dembed, 128)
    k0 = 128 // g                       # smallest k making k*dembed lane-dense
    for k in (4 * k0, 2 * k0, k0):      # prefer wider lane-dense slabs
        if k * dembed <= cap and seq % k == 0:
            return k * dembed
    return dembed                       # always valid (k = 1); may be masked vst


def _round_up8(n):
    return -(-n // 8) * 8


def _pick_row_tile(rows, lane_w, max_block_bytes=4 << 20):
    """8-aligned row tile, capped at ~4 MiB and at ceil(rows/2) so the grid has
    >=2 parallel steps (v7x dual TensorCore) whenever rows > 8."""
    if rows <= 8:
        return rows                                   # tiny table: one block
    cap_rows = max(8, (max_block_bytes // (4 * lane_w)) // 8 * 8)
    half_rows = max(8, _round_up8(-(-rows // 2)))
    return min(cap_rows, half_rows)


def sinusoidal_encoding(x, dembed, denominator=10000.0, offset=0):
    """Pallas equivalent of SinusoidalEncoding.forward(x, offset)."""
    seq = x.shape[1]
    lane_w = _pick_lane_width(seq, dembed)
    k = lane_w // dembed                # positions per flat row
    rows = seq // k
    tile_r = _pick_row_tile(rows, lane_w)
    grid = (pl.cdiv(rows, tile_r),)     # ragged last block handled by Pallas

    # Per-column (lane) constants, computed once on host in float64 for accuracy.
    col = np.arange(lane_w)
    ch = col % dembed
    col_pos = col // dembed
    inv_div = denominator ** (-2.0 * (ch // 2) / dembed)   # 1 / div_term[ch//2]
    bias = col_pos * inv_div + (ch % 2) * (np.pi / 2.0)    # cos(x) = sin(x + pi/2)
    inv_div_row = jnp.asarray(inv_div, dtype=jnp.float32).reshape(1, lane_w)
    bias_row = jnp.asarray(bias, dtype=jnp.float32).reshape(1, lane_w)
    offset_arr = jnp.asarray([offset], dtype=jnp.int32)

    kernel = functools.partial(_sincos_kernel, tile_r, k)
    # NOTE: output stays f32; emit bf16 here if the consumer tolerates it
    # (halves HBM write traffic, mainly interesting on v5e).
    flat = pl.pallas_call(
        kernel,
        out_shape=jax.ShapeDtypeStruct((rows, lane_w), jnp.float32),
        grid=grid,
        in_specs=[
            pl.BlockSpec(memory_space=pltpu.MemorySpace.SMEM),   # offset scalar
            pl.BlockSpec((1, lane_w), lambda i: (0, 0)),         # inv_div (resident)
            pl.BlockSpec((1, lane_w), lambda i: (0, 0)),         # bias (resident)
        ],
        out_specs=pl.BlockSpec((tile_r, lane_w), lambda i: (i, 0)),
        compiler_params=pltpu.CompilerParams(
            dimension_semantics=("parallel",)),
        cost_estimate=pl.CostEstimate(
            flops=3 * seq * dembed,
            transcendentals=seq * dembed,
            bytes_accessed=4 * seq * dembed),
    )(offset_arr, inv_div_row, bias_row)

    sin_cos = flat.reshape(seq, dembed)          # contiguous, exact reshape
    # torch.broadcast_to(sin_cos, x.shape[:-1] + sin_cos.shape[-2:])
    return jnp.broadcast_to(sin_cos, x.shape[:-1] + (seq, dembed))


def ref_forward(x, dembed, denominator=10000.0, offset=0):
    """Pure-JAX reference matching the PyTorch forward exactly."""
    seq = x.shape[1]
    positions = jnp.arange(offset, offset + seq, dtype=jnp.float32)
    idx = jnp.arange(0, dembed, 2, dtype=jnp.float32)
    div_term = denominator ** (idx / dembed)
    ang = positions[:, None] / div_term[None, :]
    sin_cos = jnp.stack([jnp.sin(ang), jnp.cos(ang)], axis=-1).reshape(seq, dembed)
    return jnp.broadcast_to(sin_cos, x.shape[:-1] + (seq, dembed))


if __name__ == "__main__":
    B, S, DEMBED = 2, 8, 32
    key = jax.random.PRNGKey(0)
    # x's values are never read by the module -- only its shape; use token ids.
    x = jax.random.randint(key, (B, S), 0, 1000, dtype=jnp.int32)

    y = sinusoidal_encoding(x, DEMBED)
    jax.block_until_ready(y)
    y_ref = ref_forward(x, DEMBED)
    assert y.shape == (B, S, DEMBED), f"bad shape {y.shape}"
    err = float(jnp.max(jnp.abs(y - y_ref)))
    assert err < 1e-4, f"kernel/reference mismatch: max abs err {err}"

    # Non-zero offset path (decode-style usage).
    y2 = sinusoidal_encoding(x, DEMBED, offset=5)
    jax.block_until_ready(y2)
    y2_ref = ref_forward(x, DEMBED, offset=5)
    err2 = float(jnp.max(jnp.abs(y2 - y2_ref)))
    assert err2 < 1e-4, f"offset kernel/reference mismatch: max abs err {err2}"

    print("KERNEL_OK")
</pallas_src>

<mosaic_0001>
module attributes {stable_mosaic.version = 11 : i64} {
  func.func @_sincos_kernel(%arg0: i32, %arg1: memref<1xi32, #tpu.memory_space<smem>>, %arg2: memref<1x256xf32, #tpu.memory_space<vmem>>, %arg3: memref<1x256xf32, #tpu.memory_space<vmem>>, %arg4: memref<1x256xf32, #tpu.memory_space<vmem>>) attributes {dimension_semantics = [#tpu.dimension_semantics<parallel>], iteration_bounds = array<i64: 1>, scalar_prefetch = 0 : i64, scratch_operands = 0 : i64, tpu.core_type = #tpu.core_type<tc>, window_params = [{transform_indices = @transform_0, window_bounds = array<i64: 1>}, {pipeline_mode = #tpu.pipeline_mode<synchronous>, transform_indices = @transform_1, window_bounds = array<i64: 1, 256>}, {pipeline_mode = #tpu.pipeline_mode<synchronous>, transform_indices = @transform_2, window_bounds = array<i64: 1, 256>}, {transform_indices = @transform_3, window_bounds = array<i64: 1, 256>}]} {
    %c0 = arith.constant 0 : index
    %0 = memref.load %arg1[%c0] : memref<1xi32, #tpu.memory_space<smem>>
    %c8_i32 = arith.constant 8 : i32
    %1 = arith.muli %arg0, %c8_i32 : i32
    %2 = arith.addi %0, %1 : i32
    %3 = tpu.iota {dimensions = array<i32: 0>} : vector<1x256xi32>
    %c8_i32_0 = arith.constant 8 : i32
    %4 = vector.broadcast %c8_i32_0 : i32 to vector<1x256xi32>
    %5 = arith.muli %3, %4 : vector<1x256xi32>
    %6 = vector.broadcast %2 : i32 to vector<1x256xi32>
    %7 = arith.addi %6, %5 : vector<1x256xi32>
    %8 = arith.sitofp %7 : vector<1x256xi32> to vector<1x256xf32>
    %c0_1 = arith.constant 0 : index
    %c0_2 = arith.constant 0 : index
    %9 = vector.load %arg2[%c0_1, %c0_2] : memref<1x256xf32, #tpu.memory_space<vmem>>, vector<1x256xf32>
    %10 = arith.mulf %8, %9 : vector<1x256xf32>
    %c0_3 = arith.constant 0 : index
    %c0_4 = arith.constant 0 : index
    %11 = vector.load %arg3[%c0_3, %c0_4] : memref<1x256xf32, #tpu.memory_space<vmem>>, vector<1x256xf32>
    %12 = arith.addf %10, %11 : vector<1x256xf32>
    %13 = math.sin %12 : vector<1x256xf32>
    %c0_5 = arith.constant 0 : index
    %c0_6 = arith.constant 0 : index
    %14 = vector.load %arg4[%c0_5, %c0_6] : memref<1x256xf32, #tpu.memory_space<vmem>>, vector<1x256xf32>
    tpu.vector_store %arg4[%c0_5, %c0_6], %13 {strides = array<i32>} : memref<1x256xf32, #tpu.memory_space<vmem>>, vector<1x256xf32>,
    return
  }
  func.func @transform_0(%arg0: i32) -> i32 {
    %c0_i32 = arith.constant 0 : i32
    %c0_i32_0 = arith.constant 0 : i32
    return %c0_i32 : i32
  }
  func.func @transform_1(%arg0: i32) -> (i32, i32) {
    %c0_i32 = arith.constant 0 : i32
    %c0_i32_0 = arith.constant 0 : i32
    %c0_i32_1 = arith.constant 0 : i32
    return %c0_i32, %c0_i32_0 : i32, i32
  }
  func.func @transform_2(%arg0: i32) -> (i32, i32) {
    %c0_i32 = arith.constant 0 : i32
    %c0_i32_0 = arith.constant 0 : i32
    %c0_i32_1 = arith.constant 0 : i32
    return %c0_i32, %c0_i32_0 : i32, i32
  }
  func.func @transform_3(%arg0: i32) -> (i32, i32) {
    %c0_i32 = arith.constant 0 : i32
    %c0_i32_0 = arith.constant 0 : i32
    return %arg0, %c0_i32 : i32, i32
  }
}

</mosaic_0001>

<llo_original>
// kernel: tpu_custom_call.1
$region0: #{tpu_custom_call.1}
  #allocation0 [shape = 'u32[]', space=smem, size = 0x4, offset = 0x4, fixed_abs, tag = 'smem constant byte address 0x4 - core index']
  #allocation1 [shape = 'u32[144,128]{1,0:T(1,128)}', space=vmem, size = 0x12000, scoped, tag = 'internal scratch']
  #allocation2 [shape = 's32[1]{0:T(128)S(6)}', space=smem, size = 0x200, scoped, tag = 'scoped memory for tpu_custom_call.1']
  %s0 = inlined_call_operand.<no memory space> [shape: s32[1], index: 0, kind: input, shape index: {}]
  %s1 = inlined_call_operand.vmem [shape: f32[1,256], index: 1, kind: input, shape index: {}]
  %s2 = inlined_call_operand.hbm [shape: f32[1,256], index: 2, kind: input, shape index: {}]
  %s3 = inlined_call_operand.hbm [shape: f32[1,256], index: 3, kind: output, shape index: {}]
  %s4 = sld [smem:[#allocation0]]
  $region26: #{tpu_custom_call.1} parent=0
    _
  %s6 = ssub.s32 1, %s4
  %s7 = scalar_select 0, %s6, %s4
  %8 = sst [smem:[#allocation2]] %s0
  $region1: #{tpu_custom_call.1} parent=0
    #allocation3 [shape = 'u8[1024]{0}', space=vmem, size = 0x400, scoped, tag = 'input window, operand 2, single buffered']
    #allocation4 [shape = 's32[1]{0}', space=sflag, size = 0x4, scoped, tag = 'scoped memory for tpu_custom_call.1']
    #allocation5 [shape = 's32[1]{0}', space=sflag, size = 0x4, scoped, tag = 'scoped memory for tpu_custom_call.1']
    #allocation6 [shape = 'u8[1024]{0}', space=vmem, size = 0x400, scoped, tag = 'output window, operand 0, single buffered']
    %9 = vsyncpa [#allocation4], 0
    %10 = vsyncpa [#allocation5], 0
    // Predicated region
    $region2: #{tpu_custom_call.1} parent=1 // pred_check
      _
    $region3: #{tpu_custom_call.1} parent=1 // pred_check_branch
      %12 = sbr.rel (0) target = $region5
    $region4: #{tpu_custom_call.1} parent=1 // pred_region
      _
    $region5: #{tpu_custom_call.1} parent=1 // pred_fallthru
      _
    // Predicated region
    $region6: #{tpu_custom_call.1} parent=1 // pred_check
      _
    $region7: #{tpu_custom_call.1} parent=1 // pred_check_branch
      %14 = sbr.rel (0) target = $region9
    $region8: #{tpu_custom_call.1} parent=1 // pred_region
      _
    $region9: #{tpu_custom_call.1} parent=1 // pred_fallthru
      _
    // Predicated region
    $region10: #{tpu_custom_call.1} parent=1 // pred_check
      _
    $region11: #{tpu_custom_call.1} parent=1 // pred_check_branch
      %16 = sbr.rel (0) target = $region13
    $region12: #{tpu_custom_call.1} parent=1 // pred_region
      %s18 = ssub.s32 32, 32
      %19 = vsyncadd [#allocation4], %s18
      %s21 = sshll.u32 [#allocation3], 4
      %s22 = int_to_ptr.vmem [resolvable:$true] %s21
      %24 = dma.hbm_to_vmem [thread:$0]  %s2, 32, %s22, [#allocation4]
    $region13: #{tpu_custom_call.1} parent=1 // pred_fallthru
      _
    // Predicated region
    $region14: #{tpu_custom_call.1} parent=1 // pred_check
      _
    $region15: #{tpu_custom_call.1} parent=1 // pred_check_branch
      %26 = sbr.rel (0) target = $region17
    $region16: #{tpu_custom_call.1} parent=1 // pred_region
      %27 = dma.done [#allocation4], 32
    $region17: #{tpu_custom_call.1} parent=1 // pred_fallthru
      _
    %s28 = sld [smem:[#allocation2]]
    %s29 = smul.u32 0, 8
    %s30 = sadd.s32 %s28, %s29
    %v31 = vlaneseq
    %v32 = vshrl.u32 %v31, 7
    %v33 = vmul.u32 %v32, 8
    %v34 = vstv %s30
    %v35 = vadd.s32 %v34, %v33
    %v36 = vcvt.s32.f32 %v35
    %v37 = vld [vmem:[%s1] sm:$0x3]
    %v39 = vlaneseq
    %v40 = vshrl.u32 %v39, 7
    %v41 = vsub.s32 0, %v40
    %v42 = vrot.slane %v37, %v41
    %v43 = vlaneseq
    %v44 = vshrl.u32 %v43, 7
    %v45 = vsub.s32 1, %v44
    %v46 = vrot.slane %v37, %v45
    %v49 = vmul.f32 %v36, %v42
    %v50 = vmul.f32 %v36, %v46
    %v51 = vld [vmem:[#allocation3] sm:$0x3]
    %v53 = vlaneseq
    %v54 = vshrl.u32 %v53, 7
    %v55 = vsub.s32 0, %v54
    %v56 = vrot.slane %v51, %v55
    %v57 = vlaneseq
    %v58 = vshrl.u32 %v57, 7
    %v59 = vsub.s32 1, %v58
    %v60 = vrot.slane %v51, %v59
    %v63 = vadd.f32 %v49, %v56
    %v64 = vadd.f32 %v50, %v60
    %v65 = vand.u32 2147483647, %v63
    %vm66 = vcmp.le.f32.partialorder %v65, 0.7853982
    %vm67 = vcmp.lt.s32.totalorder %v63, 0
    %v68 = vand.u32 %v63, 2139095040
    %v69 = vshrl.u32 %v68, 23
    %v70 = vsub.s32 %v69, 127
    %v71 = vand.u32 2147483647, %v63
    %v72 = vand.u32 %v71, 8388607
    %v73 = vor.u32 %v72, 8388608
    %v74 = vsub.s32 0, %v73
    %v75 = vadd.s32 %v70, 1
    %vm76 = vcmp.gt.s32.totalorder %v75, 0
    %v77 = vsel %vm76, %v75, 0
    %v78 = vshrl.u32 %v77, 5
    %v79 = vand.u32 %v77, 31
    %v80 = vsub.s32 32, %v79
    %v81 = vshrl.u32 683565275, %v80
    %v82 = vshll.u32 683565275, %v79
    %v83 = vshrl.u32 2475754826, %v80
    %v84 = vor.u32 %v82, %v83
    %v85 = vshll.u32 2475754826, %v79
    %v86 = vshrl.u32 2131351028, %v80
    %v87 = vor.u32 %v85, %v86
    %v88 = vshll.u32 2131351028, %v79
    %v89 = vshrl.u32 2102212464, %v80
    %v90 = vor.u32 %v88, %v89
    %v91 = vshll.u32 2102212464, %v79
    %v92 = vshrl.u32 920167782, %v80
    %v93 = vor.u32 %v91, %v92
    %v94 = vshll.u32 920167782, %v79
    %v95 = vshrl.u32 1326507024, %v80
    %v96 = vor.u32 %v94, %v95
    %vm97 = vcmp.lt.s32.totalorder %v78, 1
    %vm98 = vcmp.lt.s32.totalorder %v78, 2
    %vm99 = vcmp.lt.s32.totalorder %v78, 3
    %vm100 = vcmp.lt.s32.totalorder %v78, 4
    %v101 = vsel %vm97, %v81, %v84
    %v102 = vsel %vm100, %v90, 2102212464
    %v103 = vsel %vm99, %v87, %v102
    %v104 = vsel %vm98, %v101, %v103
    %v105 = vsel %vm97, %v84, %v87
    %v106 = vsel %vm100, %v93, 920167782
    %v107 = vsel %vm99, %v90, %v106
    %v108 = vsel %vm98, %v105, %v107
    %v109 = vsel %vm97, %v87, %v90
    %v110 = vsel %vm100, %v96, 1326507024
    %v111 = vsel %vm99, %v93, %v110
    %v112 = vsel %vm98, %v109, %v111
    %v113 = vshll.u32 %v73, 8
    %v114 = vmul.u32.u64.compose %v113, %v112
    %v115 = vextract.low.u32 %v114
    %v116 = vextract.high.u32 %v114
    %v117 = vmul.u32.u64.compose %v113, %v108
    %v118 = vextract.low.u32 %v117
    %v119 = vextract.high.u32 %v117
    %v120 = vmul.u32 %v113, %v104
    %v121 = vadd.s32 %v116, %v118
    %vm122 = vc.u32 %v116, %v118
    %v123 = vadd.s32 %v119, 1
    %v124 = vsel %vm122, %v123, %v119
    %v125 = vadd.s32 %v120, %v124
    %v126 = vadd.s32 %v125, 536870912
    %v127 = vshrl.u32 %v126, 30
    %v128 = vshll.u32 %v127, 30
    %v129 = vsub.s32 %v125, %v128
    %vm130 = vcmp.lt.s32.totalorder %v129, 0
    %v131 = vsub.s32 0, %v129
    %v132 = vsel %vm130, %v131, %v129
    %v133 = vclz %v132
    %v134 = vsub.s32 %v133, 2
    %vm135 = vcmp.gt.s32.totalorder 0, %v134
    %v136 = vsel %vm135, 0, %v134
    %v137 = vsub.s32 32, %v136
    %v138 = vshll.u32 %v129, %v136
    %v139 = vshrl.u32 %v121, %v137
    %v140 = vor.u32 %v138, %v139
    %v141 = vsub.s32 4294967266, %v136
    %v142 = vadd.s32 %v141, 127
    %v143 = vshll.u32 %v142, 23
    %v144 = vor.u32 4788187, %v143
    %v145 = vand.u32 2147483647, %v144
    %v147 = vcvt.s32.f32 %v140
    %v148 = vmul.f32 %v147, %v145
    %v149 = vxor.u32 %v148, 2147483648
    %v150 = vsel %vm67, %v149, %v148
    %v151 = vsub.s32 4, %v127
    %v152 = vsel %vm67, %v151, %v127
    %v153 = vsel %vm66, %v63, %v150
    %v154 = vsel %vm66, 0, %v152
    %v155 = vcosq.f32.pop %v153
    %v156 = vsinq.f32.pop %v153
    %vm157 = vweird.f32 %v63
    %v158 = vadd.s32 %v154, 3
    %v159 = vand.u32 %v158, 3
    %vm160 = vcmp.lt.s32.totalorder %v159, 2
    %vm161 = vcmp.eq.s32.totalorder %v159, 0
    %v162 = vxor.u32 %v156, 2147483648
    %v163 = vsel %vm161, %v155, %v162
    %vm164 = vcmp.eq.s32.totalorder %v159, 2
    %v165 = vxor.u32 %v155, 2147483648
    %v166 = vsel %vm164, %v165, %v156
    %v167 = vsel %vm160, %v163, %v166
    %v168 = vsel %vm157, nan, %v167
    %v169 = vand.u32 2147483647, %v64
    %vm170 = vcmp.le.f32.partialorder %v169, 0.7853982
    %vm171 = vcmp.lt.s32.totalorder %v64, 0
    %v172 = vand.u32 %v64, 2139095040
    %v173 = vshrl.u32 %v172, 23
    %v174 = vsub.s32 %v173, 127
    %v175 = vand.u32 2147483647, %v64
    %v176 = vand.u32 %v175, 8388607
    %v177 = vor.u32 %v176, 8388608
    %v178 = vsub.s32 0, %v177
    %v179 = vadd.s32 %v174, 1
    %vm180 = vcmp.gt.s32.totalorder %v179, 0
    %v181 = vsel %vm180, %v179, 0
    %v182 = vshrl.u32 %v181, 5
    %v183 = vand.u32 %v181, 31
    %v184 = vsub.s32 32, %v183
    %v185 = vshrl.u32 683565275, %v184
    %v186 = vshll.u32 683565275, %v183
    %v187 = vshrl.u32 2475754826, %v184
    %v188 = vor.u32 %v186, %v187
    %v189 = vshll.u32 2475754826, %v183
    %v190 = vshrl.u32 2131351028, %v184
    %v191 = vor.u32 %v189, %v190
    %v192 = vshll.u32 2131351028, %v183
    %v193 = vshrl.u32 2102212464, %v184
    %v194 = vor.u32 %v192, %v193
    %v195 = vshll.u32 2102212464, %v183
    %v196 = vshrl.u32 920167782, %v184
    %v197 = vor.u32 %v195, %v196
    %v198 = vshll.u32 920167782, %v183
    %v199 = vshrl.u32 1326507024, %v184
    %v200 = vor.u32 %v198, %v199
    %vm201 = vcmp.lt.s32.totalorder %v182, 1
    %vm202 = vcmp.lt.s32.totalorder %v182, 2
    %vm203 = vcmp.lt.s32.totalorder %v182, 3
    %vm204 = vcmp.lt.s32.totalorder %v182, 4
    %v205 = vsel %vm201, %v185, %v188
    %v206 = vsel %vm204, %v194, 2102212464
    %v207 = vsel %vm203, %v191, %v206
    %v208 = vsel %vm202, %v205, %v207
    %v209 = vsel %vm201, %v188, %v191
    %v210 = vsel %vm204, %v197, 920167782
    %v211 = vsel %vm203, %v194, %v210
    %v212 = vsel %vm202, %v209, %v211
    %v213 = vsel %vm201, %v191, %v194
    %v214 = vsel %vm204, %v200, 1326507024
    %v215 = vsel %vm203, %v197, %v214
    %v216 = vsel %vm202, %v213, %v215
    %v217 = vshll.u32 %v177, 8
    %v218 = vmul.u32.u64.compose %v217, %v216
    %v219 = vextract.low.u32 %v218
    %v220 = vextract.high.u32 %v218
    %v221 = vmul.u32.u64.compose %v217, %v212
    %v222 = vextract.low.u32 %v221
    %v223 = vextract.high.u32 %v221
    %v224 = vmul.u32 %v217, %v208
    %v225 = vadd.s32 %v220, %v222
    %vm226 = vc.u32 %v220, %v222
    %v227 = vadd.s32 %v223, 1
    %v228 = vsel %vm226, %v227, %v223
    %v229 = vadd.s32 %v224, %v228
    %v230 = vadd.s32 %v229, 536870912
    %v231 = vshrl.u32 %v230, 30
    %v232 = vshll.u32 %v231, 30
    %v233 = vsub.s32 %v229, %v232
    %vm234 = vcmp.lt.s32.totalorder %v233, 0
    %v235 = vsub.s32 0, %v233
    %v236 = vsel %vm234, %v235, %v233
    %v237 = vclz %v236
    %v238 = vsub.s32 %v237, 2
    %vm239 = vcmp.gt.s32.totalorder 0, %v238
    %v240 = vsel %vm239, 0, %v238
    %v241 = vsub.s32 32, %v240
    %v242 = vshll.u32 %v233, %v240
    %v243 = vshrl.u32 %v225, %v241
    %v244 = vor.u32 %v242, %v243
    %v245 = vsub.s32 4294967266, %v240
    %v246 = vadd.s32 %v245, 127
    %v247 = vshll.u32 %v246, 23
    %v248 = vor.u32 4788187, %v247
    %v249 = vand.u32 2147483647, %v248
    %v251 = vcvt.s32.f32 %v244
    %v252 = vmul.f32 %v251, %v249
    %v253 = vxor.u32 %v252, 2147483648
    %v254 = vsel %vm171, %v253, %v252
    %v255 = vsub.s32 4, %v231
    %v256 = vsel %vm171, %v255, %v231
    %v257 = vsel %vm170, %v64, %v254
    %v258 = vsel %vm170, 0, %v256
    %v259 = vcosq.f32.pop %v257
    %v260 = vsinq.f32.pop %v257
    %vm261 = vweird.f32 %v64
    %v262 = vadd.s32 %v258, 3
    %v263 = vand.u32 %v262, 3
    %vm264 = vcmp.lt.s32.totalorder %v263, 2
    %vm265 = vcmp.eq.s32.totalorder %v263, 0
    %v266 = vxor.u32 %v260, 2147483648
    %v267 = vsel %vm265, %v259, %v266
    %vm268 = vcmp.eq.s32.totalorder %v263, 2
    %v269 = vxor.u32 %v259, 2147483648
    %v270 = vsel %vm268, %v269, %v260
    %v271 = vsel %vm264, %v267, %v270
    %v272 = vsel %vm261, nan, %v271
    %v275 = vcombine.low %v168, %v272
    %v277 = vunpack.c.l.s4 1966171168
    %v278 = vunpack.c.0.s8 %v277
    %v279 = vlaneseq
    %v280 = vshrl.u32 %v279, 7
    %v281 = vsub.s32 %v278, %v280
    %v282 = vrot.slane %v275, %v281
    %v284 = vunpack.c.l.s4 1966171168
    %v285 = vunpack.c.0.s8 %v284
    %v286 = vlaneseq
    %v287 = vshrl.u32 %v286, 7
    %v288 = vsub.s32 %v285, %v287
    %v289 = vrot.slane %v282, %v288
    %v291 = vlaneseq
    %vm292 = vcmp.ge.s32.totalorder %v291, 0
    %vm293 = vcmp.lt.s32.totalorder %v291, 256
    %vm294 = vmand %vm292, %vm293
    %295 = vst.msk [vmem:[#allocation6] sm:$0x3] %vm294, %v289
    // Predicated region
    $region18: #{tpu_custom_call.1} parent=1 // pred_check
      _
    $region19: #{tpu_custom_call.1} parent=1 // pred_check_branch
      %297 = sbr.rel (0) target = $region21
    $region20: #{tpu_custom_call.1} parent=1 // pred_region
      %s299 = ssub.s32 32, 32
      %300 = vsyncadd [#allocation5], %s299
      %s302 = sshll.u32 [#allocation6], 4
      %s303 = int_to_ptr.vmem [resolvable:$true] %s302
      %305 = dma.vmem_to_hbm [thread:$0]  %s303, 32, %s3, [#allocation5]
    $region21: #{tpu_custom_call.1} parent=1 // pred_fallthru
      _
    // Predicated region
    $region22: #{tpu_custom_call.1} parent=1 // pred_check
      _
    $region23: #{tpu_custom_call.1} parent=1 // pred_check_branch
      %307 = sbr.rel (0) target = $region25
    $region24: #{tpu_custom_call.1} parent=1 // pred_region
      %308 = dma.done [#allocation5], 32
    $region25: #{tpu_custom_call.1} parent=1 // pred_fallthru
      _
    %309 = vsyncpa [#allocation4], 1
    %310 = vsyncpa [#allocation5], 1

</llo_original>
